<compile_context>
chip_gen: v6e
topology: v6e:2x2x1
jax: 0.10.0
libtpu: 0.0.40
codegen_flags: <defaults>
</compile_context>

<pallas_src>
import jax
import jax.numpy as jnp
from jax.experimental import pallas as pl
from jax.experimental.pallas import tpu as pltpu


TILE_B_MAX = 1024          # max batch rows per grid step (VMEM use is tiny)
MIN_ROWS_EVEN_SPLIT = 256  # above this, force an even #steps (v7x 2-TC balance)


def _cdiv(a, b):
    return (a + b - 1) // b


def _round_up(x, m):
    return ((x + m - 1) // m) * m


def _learning_model_kernel(x_ref,
                           w1_ref, b1_ref,
                           w2_ref, b2_ref,
                           wp_ref, bp_ref,
                           wv_ref, bv_ref,
                           policy_ref, value_ref):
    # Weights arrive pre-transposed to (in, out): plain (B,K)x(K,N) matmuls.
    x = x_ref[...]
    h = jnp.dot(x, w1_ref[...], preferred_element_type=jnp.float32) + b1_ref[...]
    h = jnp.maximum(h, 0.0)
    s = jnp.dot(h, w2_ref[...], preferred_element_type=jnp.float32) + b2_ref[...]
    s = jnp.maximum(s, 0.0)
    policy_ref[...] = (jnp.dot(s, wp_ref[...], preferred_element_type=jnp.float32)
                       + bp_ref[...]).astype(policy_ref.dtype)
    value_ref[...] = (jnp.dot(s, wv_ref[...], preferred_element_type=jnp.float32)
                      + bv_ref[...]).astype(value_ref.dtype)


def pack_params(params):
    """One-time parameter prep: transpose weights to (in, out), biases to (1, N)."""
    return {
        "w1": params["shared.w1"].T,               # (IN, H)
        "b1": params["shared.b1"].reshape(1, -1),  # (1, H)
        "w2": params["shared.w2"].T,               # (H, H)
        "b2": params["shared.b2"].reshape(1, -1),  # (1, H)
        "wp": params["policy.w"].T,                # (H, P)
        "bp": params["policy.b"].reshape(1, -1),   # (1, P)
        "wv": params["value.w"].T,                 # (H, V)
        "bv": params["value.b"].reshape(1, -1),    # (1, V)
    }


@jax.jit
def _forward_impl(x, w1, b1, w2, b2, wp, bp, wv, bv):
    B, IN = x.shape
    H = w1.shape[1]
    P = wp.shape[1]
    V = wv.shape[1]

    # Empty-batch guard (shapes are static under jit).
    if B == 0:
        return jnp.zeros((0, P), jnp.float32), jnp.zeros((0, V), jnp.float32)

    # Adaptive batch tiling; force an even number of steps for large batches
    # so the "parallel" axis shards evenly over the two v7x TensorCores.
    n_steps = _cdiv(B, TILE_B_MAX)
    if B >= MIN_ROWS_EVEN_SPLIT and n_steps % 2 == 1:
        n_steps += 1
    tile_b = _round_up(_cdiv(B, n_steps), 8)     # sublane-aligned rows per step
    grid = (_cdiv(B, tile_b),)                   # tail tile handled by masking

    policy, value = pl.pallas_call(
        _learning_model_kernel,
        out_shape=(jax.ShapeDtypeStruct((B, P), jnp.float32),
                   jax.ShapeDtypeStruct((B, V), jnp.float32)),
        grid_spec=pltpu.PrefetchScalarGridSpec(
            num_scalar_prefetch=0,
            grid=grid,
            in_specs=[
                pl.BlockSpec((tile_b, IN), lambda i: (i, 0)),  # x: streamed over batch
                pl.BlockSpec((IN, H), lambda i: (0, 0)),       # w1: VMEM-resident
                pl.BlockSpec((1, H), lambda i: (0, 0)),        # b1
                pl.BlockSpec((H, H), lambda i: (0, 0)),        # w2
                pl.BlockSpec((1, H), lambda i: (0, 0)),        # b2
                pl.BlockSpec((H, P), lambda i: (0, 0)),        # policy head W
                pl.BlockSpec((1, P), lambda i: (0, 0)),        # policy head b
                pl.BlockSpec((H, V), lambda i: (0, 0)),        # value head W
                pl.BlockSpec((1, V), lambda i: (0, 0)),        # value head b
            ],
            out_specs=[
                pl.BlockSpec((tile_b, P), lambda i: (i, 0)),   # policy output
                pl.BlockSpec((tile_b, V), lambda i: (i, 0)),   # value output
            ],
        ),
        compiler_params=pltpu.CompilerParams(
            dimension_semantics=("parallel",),
        ),
    )(x, w1, b1, w2, b2, wp, bp, wv, bv)
    return policy, value


def learning_model_forward(x, packed):
    """LearningModel.forward(inputs, task_name=None) with two task stacks."""
    policy, value = _forward_impl(
        x, packed["w1"], packed["b1"], packed["w2"], packed["b2"],
        packed["wp"], packed["bp"], packed["wv"], packed["bv"])
    return {"policy": policy, "value": value}


def init_params(key, input_dim, hidden_dim, policy_dim, value_dim):
    """Deterministic synthetic parameters (PyTorch Linear layout: (out, in))."""
    ks = jax.random.split(key, 8)
    scale = 0.1
    return {
        "shared.w1": scale * jax.random.normal(ks[0], (hidden_dim, input_dim), jnp.float32),
        "shared.b1": scale * jax.random.normal(ks[1], (hidden_dim,), jnp.float32),
        "shared.w2": scale * jax.random.normal(ks[2], (hidden_dim, hidden_dim), jnp.float32),
        "shared.b2": scale * jax.random.normal(ks[3], (hidden_dim,), jnp.float32),
        "policy.w": scale * jax.random.normal(ks[4], (policy_dim, hidden_dim), jnp.float32),
        "policy.b": scale * jax.random.normal(ks[5], (policy_dim,), jnp.float32),
        "value.w": scale * jax.random.normal(ks[6], (value_dim, hidden_dim), jnp.float32),
        "value.b": scale * jax.random.normal(ks[7], (value_dim,), jnp.float32),
    }


def _reference_forward(x, params):
    h = jnp.maximum(x @ params["shared.w1"].T + params["shared.b1"], 0.0)
    s = jnp.maximum(h @ params["shared.w2"].T + params["shared.b2"], 0.0)
    return {
        "policy": s @ params["policy.w"].T + params["policy.b"],
        "value": s @ params["value.w"].T + params["value.b"],
    }


if __name__ == "__main__":
    IN, HID, P, V = 32, 64, 16, 8
    key = jax.random.PRNGKey(0)
    kx1, kx2, kp = jax.random.split(key, 3)
    params = init_params(kp, IN, HID, P, V)
    packed = pack_params(params)   # one-time parameter prep (transpose/reshape)

    # Small batch (single grid step).
    x_small = jax.random.normal(kx1, (8, IN), jnp.float32)
    out = learning_model_forward(x_small, packed)
    out = jax.tree_util.tree_map(jax.block_until_ready, out)
    ref = _reference_forward(x_small, params)
    assert jnp.allclose(out["policy"], ref["policy"], atol=1e-5, rtol=1e-5)
    assert jnp.allclose(out["value"], ref["value"], atol=1e-5, rtol=1e-5)

    # Larger, non-tile-aligned batch: exercises the multi-step grid + masked
    # tail tile (no padding copy, no wrapper re-slicing).
    x_big = jax.random.normal(kx2, (1029, IN), jnp.float32)
    out_big = learning_model_forward(x_big, packed)
    out_big = jax.tree_util.tree_map(jax.block_until_ready, out_big)
    ref_big = _reference_forward(x_big, params)
    assert jnp.allclose(out_big["policy"], ref_big["policy"], atol=1e-5, rtol=1e-5)
    assert jnp.allclose(out_big["value"], ref_big["value"], atol=1e-5, rtol=1e-5)

    # Empty-batch guard.
    out_empty = learning_model_forward(jnp.zeros((0, IN), jnp.float32), packed)
    assert out_empty["policy"].shape == (0, P) and out_empty["value"].shape == (0, V)

    print("KERNEL_OK")
</pallas_src>

<mosaic_0001>
module attributes {stable_mosaic.version = 11 : i64} {
  func.func @_learning_model_kernel(%arg0: i32, %arg1: memref<8x32xf32, #tpu.memory_space<vmem>>, %arg2: memref<32x64xf32, #tpu.memory_space<vmem>>, %arg3: memref<1x64xf32, #tpu.memory_space<vmem>>, %arg4: memref<64x64xf32, #tpu.memory_space<vmem>>, %arg5: memref<1x64xf32, #tpu.memory_space<vmem>>, %arg6: memref<64x16xf32, #tpu.memory_space<vmem>>, %arg7: memref<1x16xf32, #tpu.memory_space<vmem>>, %arg8: memref<64x8xf32, #tpu.memory_space<vmem>>, %arg9: memref<1x8xf32, #tpu.memory_space<vmem>>, %arg10: memref<8x16xf32, #tpu.memory_space<vmem>>, %arg11: memref<8x8xf32, #tpu.memory_space<vmem>>) attributes {dimension_semantics = [#tpu.dimension_semantics<parallel>], iteration_bounds = array<i64: 1>, scalar_prefetch = 0 : i64, scratch_operands = 0 : i64, tpu.core_type = #tpu.core_type<tc>, window_params = [{transform_indices = @transform_0, window_bounds = array<i64: 8, 32>}, {pipeline_mode = #tpu.pipeline_mode<synchronous>, transform_indices = @transform_1, window_bounds = array<i64: 32, 64>}, {pipeline_mode = #tpu.pipeline_mode<synchronous>, transform_indices = @transform_2, window_bounds = array<i64: 1, 64>}, {pipeline_mode = #tpu.pipeline_mode<synchronous>, transform_indices = @transform_3, window_bounds = array<i64: 64, 64>}, {pipeline_mode = #tpu.pipeline_mode<synchronous>, transform_indices = @transform_4, window_bounds = array<i64: 1, 64>}, {pipeline_mode = #tpu.pipeline_mode<synchronous>, transform_indices = @transform_5, window_bounds = array<i64: 64, 16>}, {pipeline_mode = #tpu.pipeline_mode<synchronous>, transform_indices = @transform_6, window_bounds = array<i64: 1, 16>}, {pipeline_mode = #tpu.pipeline_mode<synchronous>, transform_indices = @transform_7, window_bounds = array<i64: 64, 8>}, {pipeline_mode = #tpu.pipeline_mode<synchronous>, transform_indices = @transform_8, window_bounds = array<i64: 1, 8>}, {transform_indices = @transform_9, window_bounds = array<i64: 8, 16>}, {transform_indices = @transform_10, window_bounds = array<i64: 8, 8>}]} {
    %c0 = arith.constant 0 : index
    %c0_0 = arith.constant 0 : index
    %0 = vector.load %arg1[%c0, %c0_0] : memref<8x32xf32, #tpu.memory_space<vmem>>, vector<8x32xf32>
    %c0_1 = arith.constant 0 : index
    %c0_2 = arith.constant 0 : index
    %1 = vector.load %arg2[%c0_1, %c0_2] : memref<32x64xf32, #tpu.memory_space<vmem>>, vector<32x64xf32>
    %cst = arith.constant dense<0.000000e+00> : vector<8x64xf32>
    %2 = tpu.matmul %0, %1, %cst {dimension_numbers = #tpu.dot_dimension_numbers<[1], [0], [0], [1], [0, 0, 1, 1], [], []>} : vector<8x32xf32>, vector<32x64xf32>, vector<8x64xf32> -> vector<8x64xf32>
    %c0_3 = arith.constant 0 : index
    %c0_4 = arith.constant 0 : index
    %3 = vector.load %arg3[%c0_3, %c0_4] : memref<1x64xf32, #tpu.memory_space<vmem>>, vector<1x64xf32>
    %4 = vector.broadcast %3 : vector<1x64xf32> to vector<8x64xf32>
    %5 = arith.addf %2, %4 : vector<8x64xf32>
    %cst_5 = arith.constant 0.000000e+00 : f32
    %6 = vector.broadcast %cst_5 : f32 to vector<8x64xf32>
    %7 = arith.maximumf %5, %6 : vector<8x64xf32>
    %c0_6 = arith.constant 0 : index
    %c0_7 = arith.constant 0 : index
    %8 = vector.load %arg4[%c0_6, %c0_7] : memref<64x64xf32, #tpu.memory_space<vmem>>, vector<64x64xf32>
    %cst_8 = arith.constant dense<0.000000e+00> : vector<8x64xf32>
    %9 = tpu.matmul %7, %8, %cst_8 {dimension_numbers = #tpu.dot_dimension_numbers<[1], [0], [0], [1], [0, 0, 1, 1], [], []>} : vector<8x64xf32>, vector<64x64xf32>, vector<8x64xf32> -> vector<8x64xf32>
    %c0_9 = arith.constant 0 : index
    %c0_10 = arith.constant 0 : index
    %10 = vector.load %arg5[%c0_9, %c0_10] : memref<1x64xf32, #tpu.memory_space<vmem>>, vector<1x64xf32>
    %11 = vector.broadcast %10 : vector<1x64xf32> to vector<8x64xf32>
    %12 = arith.addf %9, %11 : vector<8x64xf32>
    %cst_11 = arith.constant 0.000000e+00 : f32
    %13 = vector.broadcast %cst_11 : f32 to vector<8x64xf32>
    %14 = arith.maximumf %12, %13 : vector<8x64xf32>
    %c0_12 = arith.constant 0 : index
    %c0_13 = arith.constant 0 : index
    %15 = vector.load %arg6[%c0_12, %c0_13] : memref<64x16xf32, #tpu.memory_space<vmem>>, vector<64x16xf32>
    %cst_14 = arith.constant dense<0.000000e+00> : vector<8x16xf32>
    %16 = tpu.matmul %14, %15, %cst_14 {dimension_numbers = #tpu.dot_dimension_numbers<[1], [0], [0], [1], [0, 0, 1, 1], [], []>} : vector<8x64xf32>, vector<64x16xf32>, vector<8x16xf32> -> vector<8x16xf32>
    %c0_15 = arith.constant 0 : index
    %c0_16 = arith.constant 0 : index
    %17 = vector.load %arg7[%c0_15, %c0_16] : memref<1x16xf32, #tpu.memory_space<vmem>>, vector<1x16xf32>
    %18 = vector.broadcast %17 : vector<1x16xf32> to vector<8x16xf32>
    %19 = arith.addf %16, %18 : vector<8x16xf32>
    %c0_17 = arith.constant 0 : index
    %c0_18 = arith.constant 0 : index
    %20 = vector.load %arg10[%c0_17, %c0_18] : memref<8x16xf32, #tpu.memory_space<vmem>>, vector<8x16xf32>
    tpu.vector_store %arg10[%c0_17, %c0_18], %19 {strides = array<i32>} : memref<8x16xf32, #tpu.memory_space<vmem>>, vector<8x16xf32>,
    %c0_19 = arith.constant 0 : index
    %c0_20 = arith.constant 0 : index
    %21 = vector.load %arg8[%c0_19, %c0_20] : memref<64x8xf32, #tpu.memory_space<vmem>>, vector<64x8xf32>
    %cst_21 = arith.constant dense<0.000000e+00> : vector<8x8xf32>
    %22 = tpu.matmul %14, %21, %cst_21 {dimension_numbers = #tpu.dot_dimension_numbers<[1], [0], [0], [1], [0, 0, 1, 1], [], []>} : vector<8x64xf32>, vector<64x8xf32>, vector<8x8xf32> -> vector<8x8xf32>
    %c0_22 = arith.constant 0 : index
    %c0_23 = arith.constant 0 : index
    %23 = vector.load %arg9[%c0_22, %c0_23] : memref<1x8xf32, #tpu.memory_space<vmem>>, vector<1x8xf32>
    %24 = vector.broadcast %23 : vector<1x8xf32> to vector<8x8xf32>
    %25 = arith.addf %22, %24 : vector<8x8xf32>
    %c0_24 = arith.constant 0 : index
    %c0_25 = arith.constant 0 : index
    %26 = vector.load %arg11[%c0_24, %c0_25] : memref<8x8xf32, #tpu.memory_space<vmem>>, vector<8x8xf32>
    tpu.vector_store %arg11[%c0_24, %c0_25], %25 {strides = array<i32>} : memref<8x8xf32, #tpu.memory_space<vmem>>, vector<8x8xf32>,
    return
  }
  func.func @transform_0(%arg0: i32) -> (i32, i32) {
    %c0_i32 = arith.constant 0 : i32
    %c0_i32_0 = arith.constant 0 : i32
    return %arg0, %c0_i32 : i32, i32
  }
  func.func @transform_1(%arg0: i32) -> (i32, i32) {
    %c0_i32 = arith.constant 0 : i32
    %c0_i32_0 = arith.constant 0 : i32
    %c0_i32_1 = arith.constant 0 : i32
    return %c0_i32, %c0_i32_0 : i32, i32
  }
  func.func @transform_2(%arg0: i32) -> (i32, i32) {
    %c0_i32 = arith.constant 0 : i32
    %c0_i32_0 = arith.constant 0 : i32
    %c0_i32_1 = arith.constant 0 : i32
    return %c0_i32, %c0_i32_0 : i32, i32
  }
  func.func @transform_3(%arg0: i32) -> (i32, i32) {
    %c0_i32 = arith.constant 0 : i32
    %c0_i32_0 = arith.constant 0 : i32
    %c0_i32_1 = arith.constant 0 : i32
    return %c0_i32, %c0_i32_0 : i32, i32
  }
  func.func @transform_4(%arg0: i32) -> (i32, i32) {
    %c0_i32 = arith.constant 0 : i32
    %c0_i32_0 = arith.constant 0 : i32
    %c0_i32_1 = arith.constant 0 : i32
    return %c0_i32, %c0_i32_0 : i32, i32
  }
  func.func @transform_5(%arg0: i32) -> (i32, i32) {
    %c0_i32 = arith.constant 0 : i32
    %c0_i32_0 = arith.constant 0 : i32
    %c0_i32_1 = arith.constant 0 : i32
    return %c0_i32, %c0_i32_0 : i32, i32
  }
  func.func @transform_6(%arg0: i32) -> (i32, i32) {
    %c0_i32 = arith.constant 0 : i32
    %c0_i32_0 = arith.constant 0 : i32
    %c0_i32_1 = arith.constant 0 : i32
    return %c0_i32, %c0_i32_0 : i32, i32
  }
  func.func @transform_7(%arg0: i32) -> (i32, i32) {
    %c0_i32 = arith.constant 0 : i32
    %c0_i32_0 = arith.constant 0 : i32
    %c0_i32_1 = arith.constant 0 : i32
    return %c0_i32, %c0_i32_0 : i32, i32
  }
  func.func @transform_8(%arg0: i32) -> (i32, i32) {
    %c0_i32 = arith.constant 0 : i32
    %c0_i32_0 = arith.constant 0 : i32
    %c0_i32_1 = arith.constant 0 : i32
    return %c0_i32, %c0_i32_0 : i32, i32
  }
  func.func @transform_9(%arg0: i32) -> (i32, i32) {
    %c0_i32 = arith.constant 0 : i32
    %c0_i32_0 = arith.constant 0 : i32
    return %arg0, %c0_i32 : i32, i32
  }
  func.func @transform_10(%arg0: i32) -> (i32, i32) {
    %c0_i32 = arith.constant 0 : i32
    %c0_i32_0 = arith.constant 0 : i32
    return %arg0, %c0_i32 : i32, i32
  }
}

</mosaic_0001>

<llo_original>
// kernel: _forward_impl.1
$region0: #{_forward_impl.1}
  #allocation0 [shape = 'u32[]', space=smem, size = 0x4, offset = 0x4, fixed_abs, tag = 'smem constant byte address 0x4 - core index']
  #allocation1 [shape = 'u32[144,128]{1,0:T(1,128)}', space=vmem, size = 0x12000, scoped, tag = 'internal scratch']
  %s0 = inlined_call_operand.vmem [shape: f32[8,32], index: 0, kind: input, shape index: {}]
  %s1 = inlined_call_operand.vmem [shape: f32[32,64], index: 1, kind: input, shape index: {}]
  %s2 = inlined_call_operand.vmem [shape: f32[1,64], index: 2, kind: input, shape index: {}]
  %s3 = inlined_call_operand.vmem [shape: f32[64,64], index: 3, kind: input, shape index: {}]
  %s4 = inlined_call_operand.vmem [shape: f32[1,64], index: 4, kind: input, shape index: {}]
  %s5 = inlined_call_operand.vmem [shape: f32[64,16], index: 5, kind: input, shape index: {}]
  %s6 = inlined_call_operand.vmem [shape: f32[1,16], index: 6, kind: input, shape index: {}]
  %s7 = inlined_call_operand.vmem [shape: f32[64,8], index: 7, kind: input, shape index: {}]
  %s8 = inlined_call_operand.vmem [shape: f32[1,8], index: 8, kind: input, shape index: {}]
  %s9 = inlined_call_operand.hbm [shape: f32[8,16], index: 9, kind: output, shape index: {0}]
  %s10 = inlined_call_operand.hbm [shape: f32[8,8], index: 10, kind: output, shape index: {1}]
  %11 = xla_tuple %s9, %s10
  %s12 = sld [smem:[#allocation0]]
  $region54: #{_forward_impl.1} parent=0
    _
  %s14 = ssub.s32 1, %s12
  %s15 = scalar_select 0, %s14, %s12
  $region1: #{_forward_impl.1} parent=0
    #allocation2 [shape = 'u8[4096]{0}', space=vmem, size = 0x1000, scoped, tag = 'output window, operand 0, single buffered']
    #allocation3 [shape = 's32[1]{0}', space=sflag, size = 0x4, scoped, tag = 'scoped memory for _forward_impl.1']
    #allocation4 [shape = 'u8[4096]{0}', space=vmem, size = 0x1000, scoped, tag = 'output window, operand 1, single buffered']
    #allocation5 [shape = 's32[1]{0}', space=sflag, size = 0x4, scoped, tag = 'scoped memory for _forward_impl.1']
    %16 = vsyncpa [#allocation3], 0
    %17 = vsyncpa [#allocation5], 0
    // Predicated region
    $region2: #{_forward_impl.1} parent=1 // pred_check
      _
    $region3: #{_forward_impl.1} parent=1 // pred_check_branch
      %19 = sbr.rel (0) target = $region5
    $region4: #{_forward_impl.1} parent=1 // pred_region
      _
    $region5: #{_forward_impl.1} parent=1 // pred_fallthru
      _
    // Predicated region
    $region6: #{_forward_impl.1} parent=1 // pred_check
      _
    $region7: #{_forward_impl.1} parent=1 // pred_check_branch
      %21 = sbr.rel (0) target = $region9
    $region8: #{_forward_impl.1} parent=1 // pred_region
      _
    $region9: #{_forward_impl.1} parent=1 // pred_fallthru
      _
    // Predicated region
    $region10: #{_forward_impl.1} parent=1 // pred_check
      _
    $region11: #{_forward_impl.1} parent=1 // pred_check_branch
      %23 = sbr.rel (0) target = $region13
    $region12: #{_forward_impl.1} parent=1 // pred_region
      _
    $region13: #{_forward_impl.1} parent=1 // pred_fallthru
      _
    // Predicated region
    $region14: #{_forward_impl.1} parent=1 // pred_check
      _
    $region15: #{_forward_impl.1} parent=1 // pred_check_branch
      %25 = sbr.rel (0) target = $region17
    $region16: #{_forward_impl.1} parent=1 // pred_region
      _
    $region17: #{_forward_impl.1} parent=1 // pred_fallthru
      _
    // Predicated region
    $region18: #{_forward_impl.1} parent=1 // pred_check
      _
    $region19: #{_forward_impl.1} parent=1 // pred_check_branch
      %27 = sbr.rel (0) target = $region21
    $region20: #{_forward_impl.1} parent=1 // pred_region
      _
    $region21: #{_forward_impl.1} parent=1 // pred_fallthru
      _
    // Predicated region
    $region22: #{_forward_impl.1} parent=1 // pred_check
      _
    $region23: #{_forward_impl.1} parent=1 // pred_check_branch
      %29 = sbr.rel (0) target = $region25
    $region24: #{_forward_impl.1} parent=1 // pred_region
      _
    $region25: #{_forward_impl.1} parent=1 // pred_fallthru
      _
    // Predicated region
    $region26: #{_forward_impl.1} parent=1 // pred_check
      _
    $region27: #{_forward_impl.1} parent=1 // pred_check_branch
      %31 = sbr.rel (0) target = $region29
    $region28: #{_forward_impl.1} parent=1 // pred_region
      _
    $region29: #{_forward_impl.1} parent=1 // pred_fallthru
      _
    // Predicated region
    $region30: #{_forward_impl.1} parent=1 // pred_check
      _
    $region31: #{_forward_impl.1} parent=1 // pred_check_branch
      %33 = sbr.rel (0) target = $region33
    $region32: #{_forward_impl.1} parent=1 // pred_region
      _
    $region33: #{_forward_impl.1} parent=1 // pred_fallthru
      _
    // Predicated region
    $region34: #{_forward_impl.1} parent=1 // pred_check
      _
    $region35: #{_forward_impl.1} parent=1 // pred_check_branch
      %35 = sbr.rel (0) target = $region37
    $region36: #{_forward_impl.1} parent=1 // pred_region
      _
    $region37: #{_forward_impl.1} parent=1 // pred_fallthru
      _
    %v36 = vld [vmem:[%s0] sm:$0xff]
    %v37 = vld [vmem:[%s1] sm:$0xff]
    %v38 = vld [vmem:[%s1 + $0x8] sm:$0xff]
    %v39 = vld [vmem:[%s1 + $0x10] sm:$0xff]
    %v40 = vld [vmem:[%s1 + $0x18] sm:$0xff]
    %v41 = vld [vmem:[%s2] sm:$0x1]
    %v43 = vlaneseq
    %v44 = vshrl.u32 %v43, 7
    %v45 = vsub.s32 0, %v44
    %v46 = vrot.slane %v41, %v45
    %vm48 = vcmask 261120
    %v50 = vsel %vm48, %v36, 0
    %52 = vmatprep.subr.mxu0 0.0
    %53 = vmatpush1.msra.mxu0 0.0
    %54 = vmatprep.subr.mxu0 0.0
    %55 = vmatpush1.msra.mxu0 0.0
    %56 = vmatprep.subr.mxu0 0.0
    %57 = vmatpush1.msra.mxu0 0.0
    %58 = vmatprep.subr.mxu0 0.0
    %59 = vmatpush1.msra.mxu0 0.0
    %60 = vmatprep.subr.mxu0 0.0
    %61 = vmatpush1.msra.mxu0 0.0
    %62 = vmatprep.subr.mxu0 0.0
    %63 = vmatpush1.msra.mxu0 0.0
    %64 = vmatprep.subr.mxu0 0.0
    %65 = vmatpush1.msra.mxu0 0.0
    %66 = vmatprep.subr.mxu0 0.0
    %67 = vmatpush1.msra.mxu0 0.0
    %68 = vmatprep.subr.mxu0 0.0
    %69 = vmatpush1.msra.mxu0 0.0
    %70 = vmatprep.subr.mxu0 0.0
    %71 = vmatpush1.msra.mxu0 0.0
    %72 = vmatprep.subr.mxu0 0.0
    %73 = vmatpush1.msra.mxu0 0.0
    %74 = vmatprep.subr.mxu0 0.0
    %75 = vmatpush1.msra.mxu0 0.0
    %76 = vmatprep.subr.mxu0 0.0
    %77 = vmatpush1.msra.mxu0 %v40
    %78 = vmatprep.subr.mxu0 0.0
    %79 = vmatpush1.msra.mxu0 %v39
    %80 = vmatprep.subr.mxu0 0.0
    %81 = vmatpush1.msra.mxu0 %v38
    %82 = vmatprep.subr.mxu0 0.0
    %83 = vmatpush1.msra.mxu0 %v37
    %84 = vmatprep.subr.mxu0 0.0
    %85 = vmatpush2.msra.mxu0 0.0
    %86 = vmatprep.subr.mxu0 0.0
    %87 = vmatpush2.msra.mxu0 0.0
    %88 = vmatprep.subr.mxu0 0.0
    %89 = vmatpush2.msra.mxu0 0.0
    %90 = vmatprep.subr.mxu0 0.0
    %91 = vmatpush2.msra.mxu0 0.0
    %92 = vmatprep.subr.mxu0 0.0
    %93 = vmatpush2.msra.mxu0 0.0
    %94 = vmatprep.subr.mxu0 0.0
    %95 = vmatpush2.msra.mxu0 0.0
    %96 = vmatprep.subr.mxu0 0.0
    %97 = vmatpush2.msra.mxu0 0.0
    %98 = vmatprep.subr.mxu0 0.0
    %99 = vmatpush2.msra.mxu0 0.0
    %100 = vmatprep.subr.mxu0 0.0
    %101 = vmatpush2.msra.mxu0 0.0
    %102 = vmatprep.subr.mxu0 0.0
    %103 = vmatpush2.msra.mxu0 0.0
    %104 = vmatprep.subr.mxu0 0.0
    %105 = vmatpush2.msra.mxu0 0.0
    %106 = vmatprep.subr.mxu0 0.0
    %107 = vmatpush2.msra.mxu0 0.0
    %108 = vmatprep.subr.mxu0 0.0
    %109 = vmatpush2.msra.mxu0 0.0
    %110 = vmatprep.subr.mxu0 0.0
    %111 = vmatpush2.msra.mxu0 0.0
    %112 = vmatprep.subr.mxu0 0.0
    %113 = vmatpush2.msra.mxu0 0.0
    %114 = vmatprep.subr.mxu0 0.0
    %115 = vmatpush2.msra.mxu0 0.0
    %116 = vmatprep.mubr.f32.mxu0 0.0
    %117 = vmatmul.mubr.f32.gmra.mxu0 %v50
    %v118 = vpop.f32.mrf.mxu0
    %v119 = vadd.f32 %v46, %v118
    %v120 = vpop.f32.mrf.mxu0
    %121 = vdwg.mxu0
    %v122 = vmax.f32 %v119, 0.0
    %v123 = vld [vmem:[%s3] sm:$0xff]
    %v124 = vld [vmem:[%s3 + $0x8] sm:$0xff]
    %v125 = vld [vmem:[%s3 + $0x10] sm:$0xff]
    %v126 = vld [vmem:[%s3 + $0x18] sm:$0xff]
    %v127 = vld [vmem:[%s3 + $0x20] sm:$0xff]
    %v128 = vld [vmem:[%s3 + $0x28] sm:$0xff]
    %v129 = vld [vmem:[%s3 + $0x30] sm:$0xff]
    %v130 = vld [vmem:[%s3 + $0x38] sm:$0xff]
    %v131 = vld [vmem:[%s4] sm:$0x1]
    %v133 = vlaneseq
    %v134 = vshrl.u32 %v133, 7
    %v135 = vsub.s32 0, %v134
    %v136 = vrot.slane %v131, %v135
    %vm138 = vcmask 523264
    %v140 = vsel %vm138, %v122, 0
    %142 = vmatprep.subr.mxu0 0.0
    %143 = vmatpush1.msra.mxu0 0.0
    %144 = vmatprep.subr.mxu0 0.0
    %145 = vmatpush1.msra.mxu0 0.0
    %146 = vmatprep.subr.mxu0 0.0
    %147 = vmatpush1.msra.mxu0 0.0
    %148 = vmatprep.subr.mxu0 0.0
    %149 = vmatpush1.msra.mxu0 0.0
    %150 = vmatprep.subr.mxu0 0.0
    %151 = vmatpush1.msra.mxu0 0.0
    %152 = vmatprep.subr.mxu0 0.0
    %153 = vmatpush1.msra.mxu0 0.0
    %154 = vmatprep.subr.mxu0 0.0
    %155 = vmatpush1.msra.mxu0 0.0
    %156 = vmatprep.subr.mxu0 0.0
    %157 = vmatpush1.msra.mxu0 0.0
    %158 = vmatprep.subr.mxu0 0.0
    %159 = vmatpush1.msra.mxu0 %v130
    %160 = vmatprep.subr.mxu0 0.0
    %161 = vmatpush1.msra.mxu0 %v129
    %162 = vmatprep.subr.mxu0 0.0
    %163 = vmatpush1.msra.mxu0 %v128
    %164 = vmatprep.subr.mxu0 0.0
    %165 = vmatpush1.msra.mxu0 %v127
    %166 = vmatprep.subr.mxu0 0.0
    %167 = vmatpush1.msra.mxu0 %v126
    %168 = vmatprep.subr.mxu0 0.0
    %169 = vmatpush1.msra.mxu0 %v125
    %170 = vmatprep.subr.mxu0 0.0
    %171 = vmatpush1.msra.mxu0 %v124
    %172 = vmatprep.subr.mxu0 0.0
    %173 = vmatpush1.msra.mxu0 %v123
    %174 = vmatprep.subr.mxu0 0.0
    %175 = vmatpush2.msra.mxu0 0.0
    %176 = vmatprep.subr.mxu0 0.0
    %177 = vmatpush2.msra.mxu0 0.0
    %178 = vmatprep.subr.mxu0 0.0
    %179 = vmatpush2.msra.mxu0 0.0
    %180 = vmatprep.subr.mxu0 0.0
    %181 = vmatpush2.msra.mxu0 0.0
    %182 = vmatprep.subr.mxu0 0.0
    %183 = vmatpush2.msra.mxu0 0.0
    %184 = vmatprep.subr.mxu0 0.0
    %185 = vmatpush2.msra.mxu0 0.0
    %186 = vmatprep.subr.mxu0 0.0
    %187 = vmatpush2.msra.mxu0 0.0
    %188 = vmatprep.subr.mxu0 0.0
    %189 = vmatpush2.msra.mxu0 0.0
    %190 = vmatprep.subr.mxu0 0.0
    %191 = vmatpush2.msra.mxu0 0.0
    %192 = vmatprep.subr.mxu0 0.0
    %193 = vmatpush2.msra.mxu0 0.0
    %194 = vmatprep.subr.mxu0 0.0
    %195 = vmatpush2.msra.mxu0 0.0
    %196 = vmatprep.subr.mxu0 0.0
    %197 = vmatpush2.msra.mxu0 0.0
    %198 = vmatprep.subr.mxu0 0.0
    %199 = vmatpush2.msra.mxu0 0.0
    %200 = vmatprep.subr.mxu0 0.0
    %201 = vmatpush2.msra.mxu0 0.0
    %202 = vmatprep.subr.mxu0 0.0
    %203 = vmatpush2.msra.mxu0 0.0
    %204 = vmatprep.subr.mxu0 0.0
    %205 = vmatpush2.msra.mxu0 0.0
    %206 = vmatprep.mubr.f32.mxu0 0.0
    %207 = vmatmul.mubr.f32.gmra.mxu0 %v140
    %v208 = vpop.f32.mrf.mxu0
    %v209 = vadd.f32 %v136, %v208
    %v210 = vpop.f32.mrf.mxu0
    %211 = vdwg.mxu0
    %v212 = vmax.f32 %v209, 0.0
    %v213 = vld [vmem:[%s5] sm:$0xff]
    %v214 = vld [vmem:[%s5 + $0x8] sm:$0xff]
    %v215 = vld [vmem:[%s5 + $0x10] sm:$0xff]
    %v216 = vld [vmem:[%s5 + $0x18] sm:$0xff]
    %v217 = vld [vmem:[%s5 + $0x20] sm:$0xff]
    %v218 = vld [vmem:[%s5 + $0x28] sm:$0xff]
    %v219 = vld [vmem:[%s5 + $0x30] sm:$0xff]
    %v220 = vld [vmem:[%s5 + $0x38] sm:$0xff]
    %v221 = vld [vmem:[%s6] sm:$0x1]
    %v223 = vlaneseq
    %v224 = vshrl.u32 %v223, 7
    %v225 = vsub.s32 0, %v224
    %v226 = vrot.slane %v221, %v225
    %v229 = vsel %vm138, %v212, 0
    %231 = vmatprep.subr.mxu0 0.0
    %232 = vmatpush1.msra.mxu0 0.0
    %233 = vmatprep.subr.mxu0 0.0
    %234 = vmatpush1.msra.mxu0 0.0
    %235 = vmatprep.subr.mxu0 0.0
    %236 = vmatpush1.msra.mxu0 0.0
    %237 = vmatprep.subr.mxu0 0.0
    %238 = vmatpush1.msra.mxu0 0.0
    %239 = vmatprep.subr.mxu0 0.0
    %240 = vmatpush1.msra.mxu0 0.0
    %241 = vmatprep.subr.mxu0 0.0
    %242 = vmatpush1.msra.mxu0 0.0
    %243 = vmatprep.subr.mxu0 0.0
    %244 = vmatpush1.msra.mxu0 0.0
    %245 = vmatprep.subr.mxu0 0.0
    %246 = vmatpush1.msra.mxu0 0.0
    %247 = vmatprep.subr.mxu0 0.0
    %248 = vmatpush1.msra.mxu0 %v220
    %249 = vmatprep.subr.mxu0 0.0
    %250 = vmatpush1.msra.mxu0 %v219
    %251 = vmatprep.subr.mxu0 0.0
    %252 = vmatpush1.msra.mxu0 %v218
    %253 = vmatprep.subr.mxu0 0.0
    %254 = vmatpush1.msra.mxu0 %v217
    %255 = vmatprep.subr.mxu0 0.0
    %256 = vmatpush1.msra.mxu0 %v216
    %257 = vmatprep.subr.mxu0 0.0
    %258 = vmatpush1.msra.mxu0 %v215
    %259 = vmatprep.subr.mxu0 0.0
    %260 = vmatpush1.msra.mxu0 %v214
    %261 = vmatprep.subr.mxu0 0.0
    %262 = vmatpush1.msra.mxu0 %v213
    %263 = vmatprep.subr.mxu0 0.0
    %264 = vmatpush2.msra.mxu0 0.0
    %265 = vmatprep.subr.mxu0 0.0
    %266 = vmatpush2.msra.mxu0 0.0
    %267 = vmatprep.subr.mxu0 0.0
    %268 = vmatpush2.msra.mxu0 0.0
    %269 = vmatprep.subr.mxu0 0.0
    %270 = vmatpush2.msra.mxu0 0.0
    %271 = vmatprep.subr.mxu0 0.0
    %272 = vmatpush2.msra.mxu0 0.0
    %273 = vmatprep.subr.mxu0 0.0
    %274 = vmatpush2.msra.mxu0 0.0
    %275 = vmatprep.subr.mxu0 0.0
    %276 = vmatpush2.msra.mxu0 0.0
    %277 = vmatprep.subr.mxu0 0.0
    %278 = vmatpush2.msra.mxu0 0.0
    %279 = vmatprep.subr.mxu0 0.0
    %280 = vmatpush2.msra.mxu0 0.0
    %281 = vmatprep.subr.mxu0 0.0
    %282 = vmatpush2.msra.mxu0 0.0
    %283 = vmatprep.subr.mxu0 0.0
    %284 = vmatpush2.msra.mxu0 0.0
    %285 = vmatprep.subr.mxu0 0.0
    %286 = vmatpush2.msra.mxu0 0.0
    %287 = vmatprep.subr.mxu0 0.0
    %288 = vmatpush2.msra.mxu0 0.0
    %289 = vmatprep.subr.mxu0 0.0
    %290 = vmatpush2.msra.mxu0 0.0
    %291 = vmatprep.subr.mxu0 0.0
    %292 = vmatpush2.msra.mxu0 0.0
    %293 = vmatprep.subr.mxu0 0.0
    %294 = vmatpush2.msra.mxu0 0.0
    %295 = vmatprep.mubr.f32.mxu0 0.0
    %296 = vmatmul.mubr.f32.gmra.mxu0 %v229
    %v297 = vpop.f32.mrf.mxu0
    %v298 = vadd.f32 %v226, %v297
    %v299 = vpop.f32.mrf.mxu0
    %300 = vdwg.mxu0
    %vm301 = vcmask 130048
    %302 = vst.msk [vmem:[#allocation2] sm:$0xff] %vm301, %v298
    %v303 = vld [vmem:[%s7] sm:$0xff]
    %v304 = vld [vmem:[%s7 + $0x8] sm:$0xff]
    %v305 = vld [vmem:[%s7 + $0x10] sm:$0xff]
    %v306 = vld [vmem:[%s7 + $0x18] sm:$0xff]
    %v307 = vld [vmem:[%s7 + $0x20] sm:$0xff]
    %v308 = vld [vmem:[%s7 + $0x28] sm:$0xff]
    %v309 = vld [vmem:[%s7 + $0x30] sm:$0xff]
    %v310 = vld [vmem:[%s7 + $0x38] sm:$0xff]
    %v311 = vld [vmem:[%s8] sm:$0x1]
    %v313 = vlaneseq
    %v314 = vshrl.u32 %v313, 7
    %v315 = vsub.s32 0, %v314
    %v316 = vrot.slane %v311, %v315
    %318 = vmatprep.subr.mxu0 0.0
    %319 = vmatpush1.msra.mxu0 0.0
    %320 = vmatprep.subr.mxu0 0.0
    %321 = vmatpush1.msra.mxu0 0.0
    %322 = vmatprep.subr.mxu0 0.0
    %323 = vmatpush1.msra.mxu0 0.0
    %324 = vmatprep.subr.mxu0 0.0
    %325 = vmatpush1.msra.mxu0 0.0
    %326 = vmatprep.subr.mxu0 0.0
    %327 = vmatpush1.msra.mxu0 0.0
    %328 = vmatprep.subr.mxu0 0.0
    %329 = vmatpush1.msra.mxu0 0.0
    %330 = vmatprep.subr.mxu0 0.0
    %331 = vmatpush1.msra.mxu0 0.0
    %332 = vmatprep.subr.mxu0 0.0
    %333 = vmatpush1.msra.mxu0 0.0
    %334 = vmatprep.subr.mxu0 0.0
    %335 = vmatpush1.msra.mxu0 %v310
    %336 = vmatprep.subr.mxu0 0.0
    %337 = vmatpush1.msra.mxu0 %v309
    %338 = vmatprep.subr.mxu0 0.0
    %339 = vmatpush1.msra.mxu0 %v308
    %340 = vmatprep.subr.mxu0 0.0
    %341 = vmatpush1.msra.mxu0 %v307
    %342 = vmatprep.subr.mxu0 0.0
    %343 = vmatpush1.msra.mxu0 %v306
    %344 = vmatprep.subr.mxu0 0.0
    %345 = vmatpush1.msra.mxu0 %v305
    %346 = vmatprep.subr.mxu0 0.0
    %347 = vmatpush1.msra.mxu0 %v304
    %348 = vmatprep.subr.mxu0 0.0
    %349 = vmatpush1.msra.mxu0 %v303
    %350 = vmatprep.subr.mxu0 0.0
    %351 = vmatpush2.msra.mxu0 0.0
    %352 = vmatprep.subr.mxu0 0.0
    %353 = vmatpush2.msra.mxu0 0.0
    %354 = vmatprep.subr.mxu0 0.0
    %355 = vmatpush2.msra.mxu0 0.0
    %356 = vmatprep.subr.mxu0 0.0
    %357 = vmatpush2.msra.mxu0 0.0
    %358 = vmatprep.subr.mxu0 0.0
    %359 = vmatpush2.msra.mxu0 0.0
    %360 = vmatprep.subr.mxu0 0.0
    %361 = vmatpush2.msra.mxu0 0.0
    %362 = vmatprep.subr.mxu0 0.0
    %363 = vmatpush2.msra.mxu0 0.0
    %364 = vmatprep.subr.mxu0 0.0
    %365 = vmatpush2.msra.mxu0 0.0
    %366 = vmatprep.subr.mxu0 0.0
    %367 = vmatpush2.msra.mxu0 0.0
    %368 = vmatprep.subr.mxu0 0.0
    %369 = vmatpush2.msra.mxu0 0.0
    %370 = vmatprep.subr.mxu0 0.0
    %371 = vmatpush2.msra.mxu0 0.0
    %372 = vmatprep.subr.mxu0 0.0
    %373 = vmatpush2.msra.mxu0 0.0
    %374 = vmatprep.subr.mxu0 0.0
    %375 = vmatpush2.msra.mxu0 0.0
    %376 = vmatprep.subr.mxu0 0.0
    %377 = vmatpush2.msra.mxu0 0.0
    %378 = vmatprep.subr.mxu0 0.0
    %379 = vmatpush2.msra.mxu0 0.0
    %380 = vmatprep.subr.mxu0 0.0
    %381 = vmatpush2.msra.mxu0 0.0
    %382 = vmatprep.mubr.f32.mxu0 0.0
    %383 = vmatmul.mubr.f32.gmra.mxu0 %v229
    %v384 = vpop.f32.mrf.mxu0
    %v385 = vadd.f32 %v316, %v384
    %v386 = vpop.f32.mrf.mxu0
    %387 = vdwg.mxu0
    %vm388 = vcmask 64512
    %389 = vst.msk [vmem:[#allocation4] sm:$0xff] %vm388, %v385
    // Predicated region
    $region38: #{_forward_impl.1} parent=1 // pred_check
      _
    $region39: #{_forward_impl.1} parent=1 // pred_check_branch
      %391 = sbr.rel (0) target = $region41
    $region40: #{_forward_impl.1} parent=1 // pred_region
      %s393 = ssub.s32 128, 128
      %394 = vsyncadd [#allocation3], %s393
      %s396 = sshll.u32 [#allocation2], 4
      %s397 = int_to_ptr.vmem [resolvable:$true] %s396
      %399 = dma.vmem_to_hbm [thread:$0]  %s397, 128, %s9, [#allocation3]
    $region41: #{_forward_impl.1} parent=1 // pred_fallthru
      _
    // Predicated region
    $region42: #{_forward_impl.1} parent=1 // pred_check
      _
    $region43: #{_forward_impl.1} parent=1 // pred_check_branch
      %401 = sbr.rel (0) target = $region45
    $region44: #{_forward_impl.1} parent=1 // pred_region
      %s403 = ssub.s32 128, 128
      %404 = vsyncadd [#allocation5], %s403
      %s406 = sshll.u32 [#allocation4], 4
      %s407 = int_to_ptr.vmem [resolvable:$true] %s406
      %409 = dma.vmem_to_hbm [thread:$0]  %s407, 128, %s10, [#allocation5]
    $region45: #{_forward_impl.1} parent=1 // pred_fallthru
      _
    // Predicated region
    $region46: #{_forward_impl.1} parent=1 // pred_check
      _
    $region47: #{_forward_impl.1} parent=1 // pred_check_branch
      %411 = sbr.rel (0) target = $region49
    $region48: #{_forward_impl.1} parent=1 // pred_region
      %412 = dma.done [#allocation3], 128
    $region49: #{_forward_impl.1} parent=1 // pred_fallthru
      _
    // Predicated region
    $region50: #{_forward_impl.1} parent=1 // pred_check
      _
    $region51: #{_forward_impl.1} parent=1 // pred_check_branch
      %414 = sbr.rel (0) target = $region53
    $region52: #{_forward_impl.1} parent=1 // pred_region
      %415 = dma.done [#allocation5], 128
    $region53: #{_forward_impl.1} parent=1 // pred_fallthru
      _
    %416 = vsyncpa [#allocation3], 1
    %417 = vsyncpa [#allocation5], 1

</llo_original>
